<compile_context>
chip_gen: v6e
topology: v6e:2x2x1
jax: 0.10.0
libtpu: 0.0.40
codegen_flags: <defaults>
</compile_context>

<pallas_src>
import functools

import jax
import jax.numpy as jnp
from jax.experimental import pallas as pl
from jax.experimental.pallas import tpu as pltpu

INPUT_SIZE = 6 + 7 * 4    # 34
NUM_CLASSES = INPUT_SIZE  # 34


def _round_up(x, m):
    return (x + m - 1) // m * m


def _sigmoid(z):
    # sigmoid(z) == 0.5 * (tanh(z/2) + 1): a single EUP transcendental per
    # element (vs exp + reciprocal); the mul/add go to the VPU.
    return 0.5 * (jnp.tanh(0.5 * z) + 1.0)


def _autoencoder_kernel(x_ref, w1_ref, b1_ref, w2_ref, b2_ref, out_ref, *, hidden_dtype):
    # Shapes (per grid step):
    #   x_ref  : (TB, D)  input dtype   (natural HBM layout)
    #   w1_ref : (H, D)   f32           (PyTorch (out, in) layout)
    #   b1_ref : (H, 1)   f32
    #   w2_ref : (D, H)   f32
    #   b2_ref : (D, 1)   f32
    #   out_ref: (TB, D)  out dtype
    #
    # Transpose once on the XLU so all elementwise / EUP work is lane-dense
    # (batch on the 128-lane axis instead of 34/128 lane occupancy).
    xt = x_ref[...].astype(jnp.float32).T                                   # (D, TB)

    # Encoder: Linear + Sigmoid (f32 accumulation).
    h = jnp.dot(w1_ref[...], xt, preferred_element_type=jnp.float32) + b1_ref[...]
    # hidden_dtype=jnp.bfloat16 uses the bf16 EUP path (v6e/v7x only; keep f32
    # on v5e, which has no bf16 VPU/EUP).
    h = _sigmoid(h.astype(hidden_dtype))                                    # (H, TB)

    # Decoder: Linear + Sigmoid.
    y = jnp.dot(w2_ref[...], h.astype(jnp.float32),
                preferred_element_type=jnp.float32) + b2_ref[...]
    y = _sigmoid(y)                                                         # (D, TB)

    # Transpose back (XLU) and store in the natural (TB, D) layout.
    out_ref[...] = y.T.astype(out_ref.dtype)


def autoencoder_forward(x, w1, b1, w2, b2, *,
                        block_b=8192, out_dtype=None, hidden_dtype=jnp.float32):
    """Forward pass of the AutoEncoder.

    x : (B, input_size) activations (any float dtype; read as-is, no wrapper cast).
    Weights in PyTorch layout: w1 (num_classes, input_size), b1 (num_classes,),
                               w2 (input_size, num_classes), b2 (input_size,).
    Returns (B, input_size) in `out_dtype` (defaults to x.dtype).
    """
    B, D = x.shape
    H = w1.shape[0]
    assert w1.shape == (H, D) and w2.shape == (D, H)
    assert b1.shape == (H,) and b2.shape == (D,)
    assert block_b % 128 == 0, "batch tile must be a multiple of 128 lanes"
    if out_dtype is None:
        out_dtype = x.dtype

    # Batch tile: as large as block_b (amortizes per-grid-step overhead), but
    # keep >= 2 grid steps when the batch allows it so the "parallel" batch
    # axis can shard across both TensorCores on v7x.
    tb = min(block_b, _round_up(B, 128))
    if B > 128 and pl.cdiv(B, tb) < 2:
        tb = _round_up(pl.cdiv(B, 2), 128)
    grid = (pl.cdiv(B, tb),)   # ragged last tile handled by Pallas (masked writes)

    # Weights stay f32 (tiny, MXU has slack, avoids numeric drift); biases are
    # reshaped to broadcast along lanes in the transposed compute layout.
    w1c = w1.astype(jnp.float32)
    w2c = w2.astype(jnp.float32)
    b1c = b1.astype(jnp.float32).reshape(H, 1)
    b2c = b2.astype(jnp.float32).reshape(D, 1)

    cost = pl.CostEstimate(
        flops=4 * B * D * H,                               # two (D x H) matmuls over the batch
        transcendentals=B * (D + H),                       # one tanh per sigmoid element
        bytes_accessed=B * D * (jnp.dtype(x.dtype).itemsize
                                + jnp.dtype(out_dtype).itemsize)
                       + (2 * D * H + D + H) * 4,
    )

    kernel = functools.partial(_autoencoder_kernel, hidden_dtype=hidden_dtype)

    return pl.pallas_call(
        kernel,
        out_shape=jax.ShapeDtypeStruct((B, D), out_dtype),
        grid=grid,
        in_specs=[
            pl.BlockSpec((tb, D), lambda i: (i, 0)),   # x tile: streamed, double-buffered
            pl.BlockSpec((H, D), lambda i: (0, 0)),    # weights/biases: resident in VMEM
            pl.BlockSpec((H, 1), lambda i: (0, 0)),
            pl.BlockSpec((D, H), lambda i: (0, 0)),
            pl.BlockSpec((D, 1), lambda i: (0, 0)),
        ],
        out_specs=pl.BlockSpec((tb, D), lambda i: (i, 0)),
        compiler_params=pltpu.CompilerParams(
            dimension_semantics=("parallel",),           # shard batch tiles across TCs (v7x)
            vmem_limit_bytes=48 * 1024 * 1024,           # (TB,34) buffers pad lanes 34->128
        ),
        cost_estimate=cost,
    )(x, w1c, b1c, w2c, b2c)


def init_params(key, input_size, num_classes):
    """PyTorch nn.Linear default init (U[-1/sqrt(fan_in), 1/sqrt(fan_in)]), (out, in) layout."""
    k1, k2, k3, k4 = jax.random.split(key, 4)
    bound1 = 1.0 / jnp.sqrt(jnp.float32(input_size))
    bound2 = 1.0 / jnp.sqrt(jnp.float32(num_classes))
    w1 = jax.random.uniform(k1, (num_classes, input_size), jnp.float32, -bound1, bound1)
    b1 = jax.random.uniform(k2, (num_classes,), jnp.float32, -bound1, bound1)
    w2 = jax.random.uniform(k3, (input_size, num_classes), jnp.float32, -bound2, bound2)
    b2 = jax.random.uniform(k4, (input_size,), jnp.float32, -bound2, bound2)
    return w1, b1, w2, b2


def reference_forward(x, w1, b1, w2, b2):
    h = jax.nn.sigmoid(x @ w1.T + b1)
    return jax.nn.sigmoid(h @ w2.T + b2)


if __name__ == "__main__":
    key = jax.random.PRNGKey(0)
    kx, kp = jax.random.split(key)
    w1, b1, w2, b2 = init_params(kp, INPUT_SIZE, NUM_CLASSES)

    # --- small f32 check (single partial tile). ---
    batch = 8
    x_small = jax.random.uniform(kx, (batch, INPUT_SIZE), jnp.float32)
    out_small = jax.block_until_ready(autoencoder_forward(x_small, w1, b1, w2, b2))
    ref_small = reference_forward(x_small, w1, b1, w2, b2)
    assert out_small.shape == (batch, INPUT_SIZE)
    assert out_small.dtype == jnp.float32
    assert jnp.allclose(out_small, ref_small, atol=5e-3, rtol=5e-3), \
        float(jnp.max(jnp.abs(out_small - ref_small)))

    # --- ragged multi-tile batch (>=2 grid steps, partial last block) with
    #     bf16 output to exercise the in-kernel cast path. ---
    x_big = jax.random.uniform(jax.random.fold_in(kx, 1), (300, INPUT_SIZE), jnp.float32)
    out_big = jax.block_until_ready(
        autoencoder_forward(x_big, w1, b1, w2, b2, block_b=8192, out_dtype=jnp.bfloat16))
    ref_big = reference_forward(x_big, w1, b1, w2, b2)
    assert out_big.shape == (300, INPUT_SIZE)
    assert out_big.dtype == jnp.bfloat16
    assert jnp.allclose(out_big.astype(jnp.float32), ref_big, atol=2e-2, rtol=2e-2), \
        float(jnp.max(jnp.abs(out_big.astype(jnp.float32) - ref_big)))

    print("KERNEL_OK")
</pallas_src>

<mosaic_0001>
module attributes {stable_mosaic.version = 11 : i64} {
  func.func @_autoencoder_kernel(%arg0: i32, %arg1: memref<128x34xf32, #tpu.memory_space<vmem>>, %arg2: memref<34x34xf32, #tpu.memory_space<vmem>>, %arg3: memref<34x1xf32, #tpu.memory_space<vmem>>, %arg4: memref<34x34xf32, #tpu.memory_space<vmem>>, %arg5: memref<34x1xf32, #tpu.memory_space<vmem>>, %arg6: memref<128x34xf32, #tpu.memory_space<vmem>>) attributes {dimension_semantics = [#tpu.dimension_semantics<parallel>], iteration_bounds = array<i64: 1>, scalar_prefetch = 0 : i64, scratch_operands = 0 : i64, tpu.core_type = #tpu.core_type<tc>, window_params = [{transform_indices = @transform_0, window_bounds = array<i64: 128, 34>}, {pipeline_mode = #tpu.pipeline_mode<synchronous>, transform_indices = @transform_1, window_bounds = array<i64: 34, 34>}, {pipeline_mode = #tpu.pipeline_mode<synchronous>, transform_indices = @transform_2, window_bounds = array<i64: 34, 1>}, {pipeline_mode = #tpu.pipeline_mode<synchronous>, transform_indices = @transform_3, window_bounds = array<i64: 34, 34>}, {pipeline_mode = #tpu.pipeline_mode<synchronous>, transform_indices = @transform_4, window_bounds = array<i64: 34, 1>}, {transform_indices = @transform_5, window_bounds = array<i64: 128, 34>}]} {
    %c0 = arith.constant 0 : index
    %c0_0 = arith.constant 0 : index
    %0 = vector.load %arg1[%c0, %c0_0] : memref<128x34xf32, #tpu.memory_space<vmem>>, vector<128x34xf32>
    %1 = tpu.transpose %0, [1, 0] : vector<128x34xf32> -> vector<34x128xf32>
    %c0_1 = arith.constant 0 : index
    %c0_2 = arith.constant 0 : index
    %2 = vector.load %arg2[%c0_1, %c0_2] : memref<34x34xf32, #tpu.memory_space<vmem>>, vector<34x34xf32>
    %cst = arith.constant dense<0.000000e+00> : vector<34x128xf32>
    %3 = tpu.matmul %2, %1, %cst {dimension_numbers = #tpu.dot_dimension_numbers<[1], [0], [0], [1], [0, 0, 1, 1], [], []>} : vector<34x34xf32>, vector<34x128xf32>, vector<34x128xf32> -> vector<34x128xf32>
    %c0_3 = arith.constant 0 : index
    %c0_4 = arith.constant 0 : index
    %4 = vector.load %arg3[%c0_3, %c0_4] : memref<34x1xf32, #tpu.memory_space<vmem>>, vector<34x1xf32>
    %5 = vector.broadcast %4 : vector<34x1xf32> to vector<34x128xf32>
    %6 = arith.addf %3, %5 : vector<34x128xf32>
    %cst_5 = arith.constant 5.000000e-01 : f32
    %7 = vector.broadcast %cst_5 : f32 to vector<34x128xf32>
    %8 = arith.mulf %7, %6 : vector<34x128xf32>
    %9 = math.tanh %8 : vector<34x128xf32>
    %cst_6 = arith.constant 1.000000e+00 : f32
    %10 = vector.broadcast %cst_6 : f32 to vector<34x128xf32>
    %11 = arith.addf %9, %10 : vector<34x128xf32>
    %cst_7 = arith.constant 5.000000e-01 : f32
    %12 = vector.broadcast %cst_7 : f32 to vector<34x128xf32>
    %13 = arith.mulf %12, %11 : vector<34x128xf32>
    %c0_8 = arith.constant 0 : index
    %c0_9 = arith.constant 0 : index
    %14 = vector.load %arg4[%c0_8, %c0_9] : memref<34x34xf32, #tpu.memory_space<vmem>>, vector<34x34xf32>
    %cst_10 = arith.constant dense<0.000000e+00> : vector<34x128xf32>
    %15 = tpu.matmul %14, %13, %cst_10 {dimension_numbers = #tpu.dot_dimension_numbers<[1], [0], [0], [1], [0, 0, 1, 1], [], []>} : vector<34x34xf32>, vector<34x128xf32>, vector<34x128xf32> -> vector<34x128xf32>
    %c0_11 = arith.constant 0 : index
    %c0_12 = arith.constant 0 : index
    %16 = vector.load %arg5[%c0_11, %c0_12] : memref<34x1xf32, #tpu.memory_space<vmem>>, vector<34x1xf32>
    %17 = vector.broadcast %16 : vector<34x1xf32> to vector<34x128xf32>
    %18 = arith.addf %15, %17 : vector<34x128xf32>
    %cst_13 = arith.constant 5.000000e-01 : f32
    %19 = vector.broadcast %cst_13 : f32 to vector<34x128xf32>
    %20 = arith.mulf %19, %18 : vector<34x128xf32>
    %21 = math.tanh %20 : vector<34x128xf32>
    %cst_14 = arith.constant 1.000000e+00 : f32
    %22 = vector.broadcast %cst_14 : f32 to vector<34x128xf32>
    %23 = arith.addf %21, %22 : vector<34x128xf32>
    %cst_15 = arith.constant 5.000000e-01 : f32
    %24 = vector.broadcast %cst_15 : f32 to vector<34x128xf32>
    %25 = arith.mulf %24, %23 : vector<34x128xf32>
    %26 = tpu.transpose %25, [1, 0] : vector<34x128xf32> -> vector<128x34xf32>
    %c0_16 = arith.constant 0 : index
    %c0_17 = arith.constant 0 : index
    %27 = vector.load %arg6[%c0_16, %c0_17] : memref<128x34xf32, #tpu.memory_space<vmem>>, vector<128x34xf32>
    tpu.vector_store %arg6[%c0_16, %c0_17], %26 {strides = array<i32>} : memref<128x34xf32, #tpu.memory_space<vmem>>, vector<128x34xf32>,
    return
  }
  func.func @transform_0(%arg0: i32) -> (i32, i32) {
    %c0_i32 = arith.constant 0 : i32
    %c0_i32_0 = arith.constant 0 : i32
    return %arg0, %c0_i32 : i32, i32
  }
  func.func @transform_1(%arg0: i32) -> (i32, i32) {
    %c0_i32 = arith.constant 0 : i32
    %c0_i32_0 = arith.constant 0 : i32
    %c0_i32_1 = arith.constant 0 : i32
    return %c0_i32, %c0_i32_0 : i32, i32
  }
  func.func @transform_2(%arg0: i32) -> (i32, i32) {
    %c0_i32 = arith.constant 0 : i32
    %c0_i32_0 = arith.constant 0 : i32
    %c0_i32_1 = arith.constant 0 : i32
    return %c0_i32, %c0_i32_0 : i32, i32
  }
  func.func @transform_3(%arg0: i32) -> (i32, i32) {
    %c0_i32 = arith.constant 0 : i32
    %c0_i32_0 = arith.constant 0 : i32
    %c0_i32_1 = arith.constant 0 : i32
    return %c0_i32, %c0_i32_0 : i32, i32
  }
  func.func @transform_4(%arg0: i32) -> (i32, i32) {
    %c0_i32 = arith.constant 0 : i32
    %c0_i32_0 = arith.constant 0 : i32
    %c0_i32_1 = arith.constant 0 : i32
    return %c0_i32, %c0_i32_0 : i32, i32
  }
  func.func @transform_5(%arg0: i32) -> (i32, i32) {
    %c0_i32 = arith.constant 0 : i32
    %c0_i32_0 = arith.constant 0 : i32
    return %arg0, %c0_i32 : i32, i32
  }
}

</mosaic_0001>

<llo_original>
// kernel: tpu_custom_call.1
$region0: #{tpu_custom_call.1}
  #allocation0 [shape = 'u32[]', space=smem, size = 0x4, offset = 0x4, fixed_abs, tag = 'smem constant byte address 0x4 - core index']
  #allocation1 [shape = 'u32[144,128]{1,0:T(1,128)}', space=vmem, size = 0x12000, scoped, tag = 'internal scratch']
  %s0 = inlined_call_operand.hbm [shape: f32[8,34], index: 0, kind: input, shape index: {}]
  %s1 = inlined_call_operand.vmem [shape: f32[34,34], index: 1, kind: input, shape index: {}]
  %s2 = inlined_call_operand.vmem [shape: f32[34,1], index: 2, kind: input, shape index: {}]
  %s3 = inlined_call_operand.vmem [shape: f32[34,34], index: 3, kind: input, shape index: {}]
  %s4 = inlined_call_operand.vmem [shape: f32[34,1], index: 4, kind: input, shape index: {}]
  %s5 = inlined_call_operand.hbm [shape: f32[8,34], index: 5, kind: output, shape index: {}]
  %s6 = sld [smem:[#allocation0]]
  $region34: #{tpu_custom_call.1} parent=0
    _
  %s8 = ssub.s32 1, %s6
  %s9 = scalar_select 0, %s8, %s6
  $region1: #{tpu_custom_call.1} parent=0
    #allocation2 [shape = 'u8[65536]{0}', space=vmem, size = 0x10000, scoped, tag = 'input window, operand 0, single buffered']
    #allocation3 [shape = 's32[1]{0}', space=sflag, size = 0x4, scoped, tag = 'scoped memory for tpu_custom_call.1']
    #allocation4 [shape = 's32[1]{0}', space=sflag, size = 0x4, scoped, tag = 'scoped memory for tpu_custom_call.1']
    #allocation5 [shape = 'u8[65536]{0}', space=vmem, size = 0x10000, scoped, tag = 'output window, operand 0, single buffered']
    %10 = vsyncpa [#allocation3], 0
    %11 = vsyncpa [#allocation4], 0
    // Predicated region
    $region2: #{tpu_custom_call.1} parent=1 // pred_check
      _
    $region3: #{tpu_custom_call.1} parent=1 // pred_check_branch
      %13 = sbr.rel (0) target = $region5
    $region4: #{tpu_custom_call.1} parent=1 // pred_region
      %s15 = ssub.s32 2048, 128
      %16 = vsyncadd [#allocation3], %s15
      %s17 = sshll.u32 [#allocation2], 4
      %s18 = int_to_ptr.vmem [resolvable:$true] %s17
      %23 = dma.hbm_to_vmem [thread:$0]  %s0, 128, %s18, [#allocation3], 128, 128, 8
    $region5: #{tpu_custom_call.1} parent=1 // pred_fallthru
      _
    // Predicated region
    $region6: #{tpu_custom_call.1} parent=1 // pred_check
      _
    $region7: #{tpu_custom_call.1} parent=1 // pred_check_branch
      %25 = sbr.rel (0) target = $region9
    $region8: #{tpu_custom_call.1} parent=1 // pred_region
      _
    $region9: #{tpu_custom_call.1} parent=1 // pred_fallthru
      _
    // Predicated region
    $region10: #{tpu_custom_call.1} parent=1 // pred_check
      _
    $region11: #{tpu_custom_call.1} parent=1 // pred_check_branch
      %27 = sbr.rel (0) target = $region13
    $region12: #{tpu_custom_call.1} parent=1 // pred_region
      _
    $region13: #{tpu_custom_call.1} parent=1 // pred_fallthru
      _
    // Predicated region
    $region14: #{tpu_custom_call.1} parent=1 // pred_check
      _
    $region15: #{tpu_custom_call.1} parent=1 // pred_check_branch
      %29 = sbr.rel (0) target = $region17
    $region16: #{tpu_custom_call.1} parent=1 // pred_region
      _
    $region17: #{tpu_custom_call.1} parent=1 // pred_fallthru
      _
    // Predicated region
    $region18: #{tpu_custom_call.1} parent=1 // pred_check
      _
    $region19: #{tpu_custom_call.1} parent=1 // pred_check_branch
      %31 = sbr.rel (0) target = $region21
    $region20: #{tpu_custom_call.1} parent=1 // pred_region
      _
    $region21: #{tpu_custom_call.1} parent=1 // pred_fallthru
      _
    // Predicated region
    $region22: #{tpu_custom_call.1} parent=1 // pred_check
      _
    $region23: #{tpu_custom_call.1} parent=1 // pred_check_branch
      %33 = sbr.rel (0) target = $region25
    $region24: #{tpu_custom_call.1} parent=1 // pred_region
      %34 = dma.done [#allocation3], 2048
    $region25: #{tpu_custom_call.1} parent=1 // pred_fallthru
      _
    %v35 = vld [vmem:[#allocation2] sm:$0xff]
    %v36 = vld [vmem:[#allocation2 + $0x8] sm:$0xff]
    %v37 = vld [vmem:[#allocation2 + $0x10] sm:$0xff]
    %v38 = vld [vmem:[#allocation2 + $0x18] sm:$0xff]
    %v39 = vld [vmem:[#allocation2 + $0x20] sm:$0xff]
    %v40 = vld [vmem:[#allocation2 + $0x28] sm:$0xff]
    %v41 = vld [vmem:[#allocation2 + $0x30] sm:$0xff]
    %v42 = vld [vmem:[#allocation2 + $0x38] sm:$0xff]
    %v43 = vld [vmem:[#allocation2 + $0x40] sm:$0xff]
    %v44 = vld [vmem:[#allocation2 + $0x48] sm:$0xff]
    %v45 = vld [vmem:[#allocation2 + $0x50] sm:$0xff]
    %v46 = vld [vmem:[#allocation2 + $0x58] sm:$0xff]
    %v47 = vld [vmem:[#allocation2 + $0x60] sm:$0xff]
    %v48 = vld [vmem:[#allocation2 + $0x68] sm:$0xff]
    %v49 = vld [vmem:[#allocation2 + $0x70] sm:$0xff]
    %v50 = vld [vmem:[#allocation2 + $0x78] sm:$0xff]
    %v51 = vld [vmem:[%s1] sm:$0xff]
    %v52 = vld [vmem:[%s1 + $0x8] sm:$0xff]
    %v53 = vld [vmem:[%s1 + $0x10] sm:$0xff]
    %v54 = vld [vmem:[%s1 + $0x18] sm:$0xff]
    %v55 = vld [vmem:[%s1 + $0x20] sm:$0x3]
    %v56 = vld [vmem:[%s2] sm:$0xff]
    %v57 = vld [vmem:[%s2 + $0x8] sm:$0xff]
    %v58 = vld [vmem:[%s2 + $0x10] sm:$0xff]
    %v59 = vld [vmem:[%s2 + $0x18] sm:$0xff]
    %v60 = vld [vmem:[%s2 + $0x20] sm:$0x3]
    %62 = vset.pattern.permute.xlu0 0
    %63 = vperm.xlu0 %62, %v56
    %v64 = vpop.permute.xlu0 %63
    %67 = vset.pattern.permute.xlu0 0
    %68 = vperm.xlu0 %67, %v57
    %v69 = vpop.permute.xlu0 %68
    %72 = vset.pattern.permute.xlu0 0
    %73 = vperm.xlu0 %72, %v58
    %v74 = vpop.permute.xlu0 %73
    %77 = vset.pattern.permute.xlu0 0
    %78 = vperm.xlu0 %77, %v59
    %v79 = vpop.permute.xlu0 %78
    %82 = vset.pattern.permute.xlu0 0
    %83 = vperm.xlu0 %82, %v60
    %v84 = vpop.permute.xlu0 %83
    %vm86 = vcmask 277504
    %v88 = vsel %vm86, %v51, 0
    %v91 = vsel %vm86, %v52, 0
    %v94 = vsel %vm86, %v53, 0
    %v97 = vsel %vm86, %v54, 0
    %v100 = vsel %vm86, %v55, 0
    %v103 = vsel %vm86, %v35, 0
    %v106 = vsel %vm86, %v36, 0
    %v109 = vsel %vm86, %v37, 0
    %v112 = vsel %vm86, %v38, 0
    %v115 = vsel %vm86, %v39, 0
    %v118 = vsel %vm86, %v40, 0
    %v121 = vsel %vm86, %v41, 0
    %v124 = vsel %vm86, %v42, 0
    %v127 = vsel %vm86, %v43, 0
    %v130 = vsel %vm86, %v44, 0
    %v133 = vsel %vm86, %v45, 0
    %v136 = vsel %vm86, %v46, 0
    %v139 = vsel %vm86, %v47, 0
    %v142 = vsel %vm86, %v48, 0
    %v145 = vsel %vm86, %v49, 0
    %v148 = vsel %vm86, %v50, 0
    %150 = vmatprep.subr.mxu0 0.0
    %151 = vmatpush1.xpose.msra.mxu0 %v148
    %152 = vmatprep.subr.mxu0 0.0
    %153 = vmatpush1.xpose.msra.mxu0 %v145
    %154 = vmatprep.subr.mxu0 0.0
    %155 = vmatpush1.xpose.msra.mxu0 %v142
    %156 = vmatprep.subr.mxu0 0.0
    %157 = vmatpush1.xpose.msra.mxu0 %v139
    %158 = vmatprep.subr.mxu0 0.0
    %159 = vmatpush1.xpose.msra.mxu0 %v136
    %160 = vmatprep.subr.mxu0 0.0
    %161 = vmatpush1.xpose.msra.mxu0 %v133
    %162 = vmatprep.subr.mxu0 0.0
    %163 = vmatpush1.xpose.msra.mxu0 %v130
    %164 = vmatprep.subr.mxu0 0.0
    %165 = vmatpush1.xpose.msra.mxu0 %v127
    %166 = vmatprep.subr.mxu0 0.0
    %167 = vmatpush1.xpose.msra.mxu0 %v124
    %168 = vmatprep.subr.mxu0 0.0
    %169 = vmatpush1.xpose.msra.mxu0 %v121
    %170 = vmatprep.subr.mxu0 0.0
    %171 = vmatpush1.xpose.msra.mxu0 %v118
    %172 = vmatprep.subr.mxu0 0.0
    %173 = vmatpush1.xpose.msra.mxu0 %v115
    %174 = vmatprep.subr.mxu0 0.0
    %175 = vmatpush1.xpose.msra.mxu0 %v112
    %176 = vmatprep.subr.mxu0 0.0
    %177 = vmatpush1.xpose.msra.mxu0 %v109
    %178 = vmatprep.subr.mxu0 0.0
    %179 = vmatpush1.xpose.msra.mxu0 %v106
    %180 = vmatprep.subr.mxu0 0.0
    %181 = vmatpush1.xpose.msra.mxu0 %v103
    %182 = vmatprep.subr.mxu0 0.0
    %183 = vmatpush2.xpose.msra.mxu0 0.0
    %184 = vmatprep.subr.mxu0 0.0
    %185 = vmatpush2.xpose.msra.mxu0 0.0
    %186 = vmatprep.subr.mxu0 0.0
    %187 = vmatpush2.xpose.msra.mxu0 0.0
    %188 = vmatprep.subr.mxu0 0.0
    %189 = vmatpush2.xpose.msra.mxu0 0.0
    %190 = vmatprep.subr.mxu0 0.0
    %191 = vmatpush2.xpose.msra.mxu0 0.0
    %192 = vmatprep.subr.mxu0 0.0
    %193 = vmatpush2.xpose.msra.mxu0 0.0
    %194 = vmatprep.subr.mxu0 0.0
    %195 = vmatpush2.xpose.msra.mxu0 0.0
    %196 = vmatprep.subr.mxu0 0.0
    %197 = vmatpush2.xpose.msra.mxu0 0.0
    %198 = vmatprep.subr.mxu0 0.0
    %199 = vmatpush2.xpose.msra.mxu0 0.0
    %200 = vmatprep.subr.mxu0 0.0
    %201 = vmatpush2.xpose.msra.mxu0 0.0
    %202 = vmatprep.subr.mxu0 0.0
    %203 = vmatpush2.xpose.msra.mxu0 0.0
    %204 = vmatprep.subr.mxu0 0.0
    %205 = vmatpush2.xpose.msra.mxu0 0.0
    %206 = vmatprep.subr.mxu0 0.0
    %207 = vmatpush2.xpose.msra.mxu0 0.0
    %208 = vmatprep.subr.mxu0 0.0
    %209 = vmatpush2.xpose.msra.mxu0 0.0
    %210 = vmatprep.subr.mxu0 0.0
    %211 = vmatpush2.xpose.msra.mxu0 0.0
    %212 = vmatprep.subr.mxu0 0.0
    %213 = vmatpush2.xpose.msra.mxu0 0.0
    %214 = vmatprep.mubr.f32.mxu0 0.0
    %215 = vmatmul.mubr.f32.gmra.mxu0 %v88
    %v216 = vpop.f32.mrf.mxu0
    %v217 = vadd.f32 %v64, %v216
    %v218 = vpop.f32.mrf.mxu0
    %219 = vmatprep.mubr.f32.mxu0 0.0
    %220 = vmatmul.mubr.f32.gmra.mxu0 %v91
    %v221 = vpop.f32.mrf.mxu0
    %v222 = vadd.f32 %v69, %v221
    %v223 = vpop.f32.mrf.mxu0
    %224 = vmatprep.mubr.f32.mxu0 0.0
    %225 = vmatmul.mubr.f32.gmra.mxu0 %v94
    %v226 = vpop.f32.mrf.mxu0
    %v227 = vadd.f32 %v74, %v226
    %v228 = vpop.f32.mrf.mxu0
    %229 = vmatprep.mubr.f32.mxu0 0.0
    %230 = vmatmul.mubr.f32.gmra.mxu0 %v97
    %v231 = vpop.f32.mrf.mxu0
    %v232 = vadd.f32 %v79, %v231
    %v233 = vpop.f32.mrf.mxu0
    %234 = vmatprep.mubr.f32.mxu0 0.0
    %235 = vmatmul.mubr.f32.gmra.mxu0 %v100
    %v236 = vpop.f32.mrf.mxu0
    %v237 = vadd.f32 %v84, %v236
    %v238 = vpop.f32.mrf.mxu0
    %239 = vdwg.mxu0
    %v240 = vmul.f32 %v217, 0.5
    %v241 = vmul.f32 %v222, 0.5
    %v242 = vmul.f32 %v227, 0.5
    %v243 = vmul.f32 %v232, 0.5
    %v244 = vmul.f32 %v237, 0.5
    %v245 = vtanh.pop %v240
    %v246 = vtanh.pop %v241
    %v247 = vtanh.pop %v242
    %v248 = vtanh.pop %v243
    %v249 = vtanh.pop %v244
    %v250 = vadd.f32 %v245, 1.0
    %v251 = vadd.f32 %v246, 1.0
    %v252 = vadd.f32 %v247, 1.0
    %v253 = vadd.f32 %v248, 1.0
    %v254 = vadd.f32 %v249, 1.0
    %v255 = vmul.f32 %v250, 0.5
    %v256 = vmul.f32 %v251, 0.5
    %v257 = vmul.f32 %v252, 0.5
    %v258 = vmul.f32 %v253, 0.5
    %v259 = vmul.f32 %v254, 0.5
    %v260 = vld [vmem:[%s3] sm:$0xff]
    %v261 = vld [vmem:[%s3 + $0x8] sm:$0xff]
    %v262 = vld [vmem:[%s3 + $0x10] sm:$0xff]
    %v263 = vld [vmem:[%s3 + $0x18] sm:$0xff]
    %v264 = vld [vmem:[%s3 + $0x20] sm:$0x3]
    %v265 = vld [vmem:[%s4] sm:$0xff]
    %v266 = vld [vmem:[%s4 + $0x8] sm:$0xff]
    %v267 = vld [vmem:[%s4 + $0x10] sm:$0xff]
    %v268 = vld [vmem:[%s4 + $0x18] sm:$0xff]
    %v269 = vld [vmem:[%s4 + $0x20] sm:$0x3]
    %271 = vset.pattern.permute.xlu0 0
    %272 = vperm.xlu0 %271, %v265
    %v273 = vpop.permute.xlu0 %272
    %276 = vset.pattern.permute.xlu0 0
    %277 = vperm.xlu0 %276, %v266
    %v278 = vpop.permute.xlu0 %277
    %281 = vset.pattern.permute.xlu0 0
    %282 = vperm.xlu0 %281, %v267
    %v283 = vpop.permute.xlu0 %282
    %286 = vset.pattern.permute.xlu0 0
    %287 = vperm.xlu0 %286, %v268
    %v288 = vpop.permute.xlu0 %287
    %291 = vset.pattern.permute.xlu0 0
    %292 = vperm.xlu0 %291, %v269
    %v293 = vpop.permute.xlu0 %292
    %v296 = vsel %vm86, %v260, 0
    %v299 = vsel %vm86, %v261, 0
    %v302 = vsel %vm86, %v262, 0
    %v305 = vsel %vm86, %v263, 0
    %v308 = vsel %vm86, %v264, 0
    %vm310 = vcmask 1041408
    %v312 = vsel %vm310, %v259, 0
    %314 = vmatprep.subr.mxu0 0.0
    %315 = vmatpush1.msra.mxu0 0.0
    %316 = vmatprep.subr.mxu0 0.0
    %317 = vmatpush1.msra.mxu0 0.0
    %318 = vmatprep.subr.mxu0 0.0
    %319 = vmatpush1.msra.mxu0 0.0
    %320 = vmatprep.subr.mxu0 0.0
    %321 = vmatpush1.msra.mxu0 0.0
    %322 = vmatprep.subr.mxu0 0.0
    %323 = vmatpush1.msra.mxu0 0.0
    %324 = vmatprep.subr.mxu0 0.0
    %325 = vmatpush1.msra.mxu0 0.0
    %326 = vmatprep.subr.mxu0 0.0
    %327 = vmatpush1.msra.mxu0 0.0
    %328 = vmatprep.subr.mxu0 0.0
    %329 = vmatpush1.msra.mxu0 0.0
    %330 = vmatprep.subr.mxu0 0.0
    %331 = vmatpush1.msra.mxu0 0.0
    %332 = vmatprep.subr.mxu0 0.0
    %333 = vmatpush1.msra.mxu0 0.0
    %334 = vmatprep.subr.mxu0 0.0
    %335 = vmatpush1.msra.mxu0 0.0
    %336 = vmatprep.subr.mxu0 0.0
    %337 = vmatpush1.msra.mxu0 %v312
    %338 = vmatprep.subr.mxu0 0.0
    %339 = vmatpush1.msra.mxu0 %v258
    %340 = vmatprep.subr.mxu0 0.0
    %341 = vmatpush1.msra.mxu0 %v257
    %342 = vmatprep.subr.mxu0 0.0
    %343 = vmatpush1.msra.mxu0 %v256
    %344 = vmatprep.subr.mxu0 0.0
    %345 = vmatpush1.msra.mxu0 %v255
    %346 = vmatprep.subr.mxu0 0.0
    %347 = vmatpush2.msra.mxu0 0.0
    %348 = vmatprep.subr.mxu0 0.0
    %349 = vmatpush2.msra.mxu0 0.0
    %350 = vmatprep.subr.mxu0 0.0
    %351 = vmatpush2.msra.mxu0 0.0
    %352 = vmatprep.subr.mxu0 0.0
    %353 = vmatpush2.msra.mxu0 0.0
    %354 = vmatprep.subr.mxu0 0.0
    %355 = vmatpush2.msra.mxu0 0.0
    %356 = vmatprep.subr.mxu0 0.0
    %357 = vmatpush2.msra.mxu0 0.0
    %358 = vmatprep.subr.mxu0 0.0
    %359 = vmatpush2.msra.mxu0 0.0
    %360 = vmatprep.subr.mxu0 0.0
    %361 = vmatpush2.msra.mxu0 0.0
    %362 = vmatprep.subr.mxu0 0.0
    %363 = vmatpush2.msra.mxu0 0.0
    %364 = vmatprep.subr.mxu0 0.0
    %365 = vmatpush2.msra.mxu0 0.0
    %366 = vmatprep.subr.mxu0 0.0
    %367 = vmatpush2.msra.mxu0 0.0
    %368 = vmatprep.subr.mxu0 0.0
    %369 = vmatpush2.msra.mxu0 0.0
    %370 = vmatprep.subr.mxu0 0.0
    %371 = vmatpush2.msra.mxu0 0.0
    %372 = vmatprep.subr.mxu0 0.0
    %373 = vmatpush2.msra.mxu0 0.0
    %374 = vmatprep.subr.mxu0 0.0
    %375 = vmatpush2.msra.mxu0 0.0
    %376 = vmatprep.subr.mxu0 0.0
    %377 = vmatpush2.msra.mxu0 0.0
    %378 = vmatprep.mubr.f32.mxu0 0.0
    %379 = vmatmul.mubr.f32.gmra.mxu0 %v296
    %v380 = vpop.f32.mrf.mxu0
    %v381 = vadd.f32 %v273, %v380
    %v382 = vpop.f32.mrf.mxu0
    %383 = vmatprep.mubr.f32.mxu0 0.0
    %384 = vmatmul.mubr.f32.gmra.mxu0 %v299
    %v385 = vpop.f32.mrf.mxu0
    %v386 = vadd.f32 %v278, %v385
    %v387 = vpop.f32.mrf.mxu0
    %388 = vmatprep.mubr.f32.mxu0 0.0
    %389 = vmatmul.mubr.f32.gmra.mxu0 %v302
    %v390 = vpop.f32.mrf.mxu0
    %v391 = vadd.f32 %v283, %v390
    %v392 = vpop.f32.mrf.mxu0
    %393 = vmatprep.mubr.f32.mxu0 0.0
    %394 = vmatmul.mubr.f32.gmra.mxu0 %v305
    %v395 = vpop.f32.mrf.mxu0
    %v396 = vadd.f32 %v288, %v395
    %v397 = vpop.f32.mrf.mxu0
    %398 = vmatprep.mubr.f32.mxu0 0.0
    %399 = vmatmul.mubr.f32.gmra.mxu0 %v308
    %v400 = vpop.f32.mrf.mxu0
    %v401 = vadd.f32 %v293, %v400
    %v402 = vpop.f32.mrf.mxu0
    %403 = vdwg.mxu0
    %v404 = vmul.f32 %v381, 0.5
    %v405 = vmul.f32 %v386, 0.5
    %v406 = vmul.f32 %v391, 0.5
    %v407 = vmul.f32 %v396, 0.5
    %v408 = vmul.f32 %v401, 0.5
    %v409 = vtanh.pop %v404
    %v410 = vtanh.pop %v405
    %v411 = vtanh.pop %v406
    %v412 = vtanh.pop %v407
    %v413 = vtanh.pop %v408
    %v414 = vadd.f32 %v409, 1.0
    %v415 = vadd.f32 %v410, 1.0
    %v416 = vadd.f32 %v411, 1.0
    %v417 = vadd.f32 %v412, 1.0
    %v418 = vadd.f32 %v413, 1.0
    %v419 = vmul.f32 %v414, 0.5
    %v420 = vmul.f32 %v415, 0.5
    %v421 = vmul.f32 %v416, 0.5
    %v422 = vmul.f32 %v417, 0.5
    %v423 = vmul.f32 %v418, 0.5
    %424 = vxpose.xlu0.b32.start [1/16] %v419, 128
    %425 = vxpose.xlu0.b32.cont [2/16] %v420, 128
    %426 = vxpose.xlu0.b32.cont [3/16] %v421, 128
    %427 = vxpose.xlu0.b32.cont [4/16] %v422, 128
    %428 = vxpose.xlu0.b32.cont [5/16] %v423, 128
    %429 = vxpose.xlu0.b32.cont [6/16] 0.0, 128
    %430 = vxpose.xlu0.b32.cont [7/16] 0.0, 128
    %431 = vxpose.xlu0.b32.cont [8/16] 0.0, 128
    %432 = vxpose.xlu0.b32.cont [9/16] 0.0, 128
    %433 = vxpose.xlu0.b32.cont [10/16] 0.0, 128
    %434 = vxpose.xlu0.b32.cont [11/16] 0.0, 128
    %435 = vxpose.xlu0.b32.cont [12/16] 0.0, 128
    %436 = vxpose.xlu0.b32.cont [13/16] 0.0, 128
    %437 = vxpose.xlu0.b32.cont [14/16] 0.0, 128
    %438 = vxpose.xlu0.b32.cont [15/16] 0.0, 128
    %439 = vxpose.xlu0.b32.end [16/16] 0.0, 128
    %v440 = vpop.trf.xlu0
    %v441 = vpop.trf.xlu0
    %v442 = vpop.trf.xlu0
    %v443 = vpop.trf.xlu0
    %v444 = vpop.trf.xlu0
    %v445 = vpop.trf.xlu0
    %v446 = vpop.trf.xlu0
    %v447 = vpop.trf.xlu0
    %v448 = vpop.trf.xlu0
    %v449 = vpop.trf.xlu0
    %v450 = vpop.trf.xlu0
    %v451 = vpop.trf.xlu0
    %v452 = vpop.trf.xlu0
    %v453 = vpop.trf.xlu0
    %v454 = vpop.trf.xlu0
    %v455 = vpop.trf.xlu0
    %456 = vst.msk [vmem:[#allocation5] sm:$0xff] %vm86, %v440
    %457 = vst.msk [vmem:[#allocation5 + $0x8] sm:$0xff] %vm86, %v441
    %458 = vst.msk [vmem:[#allocation5 + $0x10] sm:$0xff] %vm86, %v442
    %459 = vst.msk [vmem:[#allocation5 + $0x18] sm:$0xff] %vm86, %v443
    %460 = vst.msk [vmem:[#allocation5 + $0x20] sm:$0xff] %vm86, %v444
    %461 = vst.msk [vmem:[#allocation5 + $0x28] sm:$0xff] %vm86, %v445
    %462 = vst.msk [vmem:[#allocation5 + $0x30] sm:$0xff] %vm86, %v446
    %463 = vst.msk [vmem:[#allocation5 + $0x38] sm:$0xff] %vm86, %v447
    %464 = vst.msk [vmem:[#allocation5 + $0x40] sm:$0xff] %vm86, %v448
    %465 = vst.msk [vmem:[#allocation5 + $0x48] sm:$0xff] %vm86, %v449
    %466 = vst.msk [vmem:[#allocation5 + $0x50] sm:$0xff] %vm86, %v450
    %467 = vst.msk [vmem:[#allocation5 + $0x58] sm:$0xff] %vm86, %v451
    %468 = vst.msk [vmem:[#allocation5 + $0x60] sm:$0xff] %vm86, %v452
    %469 = vst.msk [vmem:[#allocation5 + $0x68] sm:$0xff] %vm86, %v453
    %470 = vst.msk [vmem:[#allocation5 + $0x70] sm:$0xff] %vm86, %v454
    %471 = vst.msk [vmem:[#allocation5 + $0x78] sm:$0xff] %vm86, %v455
    // Predicated region
    $region26: #{tpu_custom_call.1} parent=1 // pred_check
      _
    $region27: #{tpu_custom_call.1} parent=1 // pred_check_branch
      %473 = sbr.rel (0) target = $region29
    $region28: #{tpu_custom_call.1} parent=1 // pred_region
      %s475 = ssub.s32 2048, 128
      %476 = vsyncadd [#allocation4], %s475
      %s477 = sshll.u32 [#allocation5], 4
      %s478 = int_to_ptr.vmem [resolvable:$true] %s477
      %483 = dma.vmem_to_hbm [thread:$0]  %s478, 128, %s5, [#allocation4], 128, 128, 8
    $region29: #{tpu_custom_call.1} parent=1 // pred_fallthru
      _
    // Predicated region
    $region30: #{tpu_custom_call.1} parent=1 // pred_check
      _
    $region31: #{tpu_custom_call.1} parent=1 // pred_check_branch
      %485 = sbr.rel (0) target = $region33
    $region32: #{tpu_custom_call.1} parent=1 // pred_region
      %486 = dma.done [#allocation4], 2048
    $region33: #{tpu_custom_call.1} parent=1 // pred_fallthru
      _
    %487 = vsyncpa [#allocation3], 1
    %488 = vsyncpa [#allocation4], 1

</llo_original>
